<compile_context>
chip_gen: v6e
topology: v6e:2x2x1
jax: 0.10.0
libtpu: 0.0.40
codegen_flags: <defaults>
</compile_context>

<pallas_src>
import functools
import math

import jax
import jax.numpy as jnp
from jax.experimental import pallas as pl

_LANES = 128                                # vreg lane width; one 128-lane block per batch row
_HALF_LOG_2PI = 0.5 * math.log(2.0 * math.pi)


def _align8(n):
    return ((int(n) + 7) // 8) * 8


def _rl_actor_kernel(xa_ref, msu_ref, p_ref, out_ref, *,
                     B, N, G, KA, HA, KM, HM, R_AW2, R_MW1, R_MW2,
                     deterministic, approx_recip):
    f32 = jnp.float32

    def recip(x):
        return pl.reciprocal(x, approx=True) if approx_recip else 1.0 / x

    # ---- unpack the single parameter slab (lane-offset-0 slices, 8-aligned row blocks) ----
    aw1 = p_ref[0:HA, 0:KA]                       # ASU layer-1 weights (bias folded in)
    aw2 = p_ref[R_AW2:R_AW2 + 1, 0:HA]            # ASU layer-2 row (bias folded in)
    mw1 = p_ref[R_MW1:R_MW1 + KM, 0:HM]           # MSU layer-1 weights (bias folded in)
    mw2 = p_ref[R_MW2:R_MW2 + HM, 0:2]            # MSU layer-2 weights (bias folded in)

    # ---- ASU stand-in: per-asset 2-layer MLP, assets on the lane axis (f32 MXU, no casts) ----
    h_t = jnp.maximum(jnp.dot(aw1, xa_ref[...], preferred_element_type=f32), 0.0)   # (HA, B*128)
    s_row = jnp.dot(aw2, h_t, preferred_element_type=f32)                            # (1, B*128)
    # (1, B*128) -> (B, 128): per-batch slices are 128-lane aligned -> pure vreg selects.
    scores = jnp.concatenate(
        [s_row[:, b * _LANES:(b + 1) * _LANES] for b in range(B)], axis=0)           # (B, 128)

    lane = jax.lax.broadcasted_iota(jnp.int32, (B, _LANES), 1)

    # ---- scores_p = softmax(scores, dim=-1) over the N valid lanes ----
    sm = jnp.where(lane < N, scores, -jnp.inf)
    z = sm - jnp.max(sm, axis=-1, keepdims=True)
    ez = jnp.exp(z)                                # padded lanes: exp(-inf) = 0
    scores_p = ez * recip(jnp.sum(ez, axis=-1, keepdims=True))

    # ---- winner / loser books (long / short), masked to the valid lanes ----
    sign = jnp.where(scores > 0.0, 1.0, jnp.where(scores < 0.0, -1.0, 0.0))
    books = jnp.concatenate([scores, sign * (1.0 - scores)], axis=0)                  # (2B, 128)
    lane2 = jax.lax.broadcasted_iota(jnp.int32, (2 * B, _LANES), 1)
    books = jnp.where(lane2 < N, books, -jnp.inf)

    # ---- top-G + softmax + scatter, both books in one pass.
    # One XLU max-reduce per step; first-argmax one-hot comes from the tie mask via an MXU
    # prefix-sum (lowest-index tie-break, matching torch.topk), not a second lane reduce.
    tri = (jax.lax.broadcasted_iota(jnp.int32, (_LANES, _LANES), 0)
           <= jax.lax.broadcasted_iota(jnp.int32, (_LANES, _LANES), 1)).astype(f32)
    vmax = jnp.max(books, axis=-1, keepdims=True)
    work = books
    sel_union = jnp.zeros((2 * B, _LANES), jnp.bool_)
    for _ in range(G):                             # static unroll, G <= N
        m = jnp.max(work, axis=-1, keepdims=True)
        tie = work == m
        cum = jnp.dot(tie.astype(f32), tri, preferred_element_type=f32)  # inclusive prefix count
        sel = tie & (cum < 1.5)                    # first tied lane only
        sel_union = sel_union | sel
        work = jnp.where(sel, -jnp.inf, work)
    e_sel = jnp.where(sel_union, jnp.exp(books - vmax), 0.0)
    ratios = e_sel * recip(jnp.sum(e_sel, axis=-1, keepdims=True))        # (2B, 128); 0 beyond N

    # ---- MSU stand-in: 2-layer MLP -> (mu, raw_sigma); batch on the sublane axis ----
    xm_aug = msu_ref[:, 0:KM]                      # (B, KM)  [x_m | 1]
    eps = msu_ref[:, KM:KM + 1]                    # (B, 1)   N(0,1), drawn in the wrapper
    h_m = jnp.maximum(jnp.dot(xm_aug, mw1, preferred_element_type=f32), 0.0)   # (B, HM)
    res = jnp.dot(h_m, mw2, preferred_element_type=f32)                         # (B, 2)
    mu = res[:, 0:1]
    sraw = res[:, 1:2]
    # stable softplus, floored so log(sigma) stays finite (review correctness note)
    sigma = jnp.maximum(jnp.maximum(sraw, 0.0) + jnp.log(1.0 + jnp.exp(-jnp.abs(sraw))), 1e-12)

    if deterministic:
        rho = jnp.clip(mu, 0.0, 1.0)
    else:
        sample = mu + sigma * eps
        rho = jnp.clip(sample, 0.0, 1.0)
        # log N(sample; mu, sigma) of the *unclipped* sample (matches the torch reference)
        logp = -0.5 * eps * eps - jnp.log(sigma) - _HALF_LOG_2PI

    # ---- output slab: lane-offset-0 row-block stores; no in-vreg packing of a wide row ----
    out_ref[...] = jnp.zeros_like(out_ref)
    out_ref[0:2 * B, :] = ratios                   # rows [0:B) long weights, [B:2B) short weights
    out_ref[2 * B:3 * B, :] = scores_p
    out_ref[3 * B:4 * B, 0:1] = rho
    if not deterministic:
        out_ref[4 * B:5 * B, 0:1] = logp


@functools.partial(jax.jit, static_argnames=("G", "deterministic"))
def rl_actor_forward(params, x_a, x_m, rng_key, G, *, deterministic=False):
    """Fused RLActor forward. Returns (weights, rho, scores_p, rho_log_p)."""
    B, N, W, Fa = x_a.shape
    _, Wm, Fm = x_m.shape
    WFA, WFM = W * Fa, Wm * Fm
    HID = params["asu_w1"].shape[1]
    assert 0 < G <= N <= _LANES
    f32 = jnp.float32

    KA, HA = WFA + 1, HID + 1        # +1: ones-feature / bias-unit (biases folded into matmuls)
    KM, HM = WFM + 1, HID + 1

    # ---- ASU input slab (KA, B*128): assets on lanes, one full 128-lane block per batch row;
    #      last row is the ones-feature carrying the layer-1 bias. ----
    xa = jnp.transpose(x_a.reshape(B, N, WFA).astype(f32), (2, 0, 1))     # (WFA, B, N)
    xa = jnp.pad(xa, ((0, 0), (0, 0), (0, _LANES - N)))                    # (WFA, B, 128)
    xa_slab = jnp.concatenate([xa, jnp.ones((1, B, _LANES), f32)],
                              axis=0).reshape(KA, B * _LANES)

    # ---- MSU input slab: [x_m | 1 | eps]  (eps drawn wrapper-side; no in-kernel PRNG) ----
    eps = jax.random.normal(rng_key, (B, 1), dtype=f32)
    msu_slab = jnp.concatenate(
        [x_m.reshape(B, WFM).astype(f32), jnp.ones((B, 1), f32), eps], axis=1)   # (B, KM+1)

    # ---- one packed parameter slab (so the whole forward is 4 DMAs) ----
    asu_w1 = params["asu_w1"].astype(f32)                          # (WFA, HID)
    asu_b1 = params["asu_b1"].reshape(HID).astype(f32)
    asu_w2 = params["asu_w2"].reshape(HID).astype(f32)
    asu_b2 = params["asu_b2"].reshape(1).astype(f32)
    msu_w1 = params["msu_w1"].astype(f32)                          # (WFM, HID)
    msu_b1 = params["msu_b1"].reshape(HID).astype(f32)
    msu_w2 = params["msu_w2"].astype(f32)                          # (HID, 2)
    msu_b2 = params["msu_b2"].reshape(2).astype(f32)

    aw1_aug = jnp.concatenate([asu_w1.T, asu_b1[:, None]], axis=1)                    # (HID, KA)
    aw1_aug = jnp.concatenate(
        [aw1_aug,
         jnp.concatenate([jnp.zeros((1, WFA), f32), jnp.ones((1, 1), f32)], axis=1)],
        axis=0)                                                                        # (HA, KA)
    aw2_aug = jnp.concatenate([asu_w2, asu_b2], axis=0)[None, :]                       # (1, HA)
    mw1_aug = jnp.concatenate([msu_w1, jnp.zeros((WFM, 1), f32)], axis=1)              # (WFM, HM)
    mw1_aug = jnp.concatenate(
        [mw1_aug, jnp.concatenate([msu_b1, jnp.ones((1,), f32)], axis=0)[None, :]],
        axis=0)                                                                        # (KM, HM)
    mw2_aug = jnp.concatenate([msu_w2, msu_b2[None, :]], axis=0)                       # (HM, 2)

    R_AW2 = _align8(HA)
    R_MW1 = _align8(R_AW2 + 1)
    R_MW2 = _align8(R_MW1 + KM)
    PROWS = _align8(R_MW2 + HM)
    pslab = jnp.zeros((PROWS, _LANES), f32)
    pslab = pslab.at[0:HA, 0:KA].set(aw1_aug)
    pslab = pslab.at[R_AW2:R_AW2 + 1, 0:HA].set(aw2_aug)
    pslab = pslab.at[R_MW1:R_MW1 + KM, 0:HM].set(mw1_aug)
    pslab = pslab.at[R_MW2:R_MW2 + HM, 0:2].set(mw2_aug)
    # TODO(synk): for repeated rollouts, hoist this parameter packing out of the per-step call.

    OUT_ROWS = _align8(5 * B)        # (8,128)-aligned output slab -> full-vreg writeback DMA

    approx_recip = jax.default_backend() == "tpu"   # pl.reciprocal only has a TPU lowering

    cost = pl.CostEstimate(
        flops=int(2 * HA * KA * B * _LANES + 2 * HA * B * _LANES
                  + 2 * B * KM * HM + 4 * B * HM
                  + G * 2 * (2 * B) * _LANES * _LANES + 32 * B * _LANES),
        transcendentals=int(3 * B * _LANES + 8 * B),
        bytes_accessed=int(4 * (xa_slab.size + msu_slab.size + pslab.size
                                + OUT_ROWS * _LANES)),
    )

    # Grid-less pallas_call: one invocation, whole (tiny) slabs resident in VMEM,
    # no pipeline / double-buffering machinery to set up.
    slab = pl.pallas_call(
        functools.partial(
            _rl_actor_kernel, B=B, N=N, G=G, KA=KA, HA=HA, KM=KM, HM=HM,
            R_AW2=R_AW2, R_MW1=R_MW1, R_MW2=R_MW2,
            deterministic=deterministic, approx_recip=approx_recip),
        out_shape=jax.ShapeDtypeStruct((OUT_ROWS, _LANES), f32),
        cost_estimate=cost,
    )(xa_slab, msu_slab, pslab)

    weights = jnp.concatenate([slab[0:B, 0:N], slab[B:2 * B, 0:N]], axis=-1)  # [long | short]
    scores_p = slab[2 * B:3 * B, 0:N]
    rho = slab[3 * B:4 * B, 0]
    rho_log_p = None if deterministic else slab[4 * B:5 * B, 0]
    return weights, rho, scores_p, rho_log_p


if __name__ == "__main__":
    B, N_ASSETS, W, FA, FM, HID, G = 2, 8, 8, 3, 4, 32, 2

    key = jax.random.PRNGKey(0)
    ks = jax.random.split(key, 8)
    x_a = jax.random.normal(ks[0], (B, N_ASSETS, W, FA), dtype=jnp.float32)
    x_m = jax.random.normal(ks[1], (B, W, FM), dtype=jnp.float32)

    params = {
        "asu_w1": 0.1 * jax.random.normal(ks[2], (W * FA, HID), dtype=jnp.float32),
        "asu_b1": jnp.zeros((1, HID), jnp.float32),
        "asu_w2": 0.1 * jax.random.normal(ks[3], (HID, 1), dtype=jnp.float32),
        "asu_b2": jnp.zeros((1, 1), jnp.float32),
        "msu_w1": 0.1 * jax.random.normal(ks[4], (W * FM, HID), dtype=jnp.float32),
        "msu_b1": jnp.zeros((1, HID), jnp.float32),
        "msu_w2": 0.1 * jax.random.normal(ks[5], (HID, 2), dtype=jnp.float32),
        "msu_b2": jnp.zeros((1, 2), jnp.float32),
    }

    weights, rho, scores_p, rho_log_p = rl_actor_forward(params, x_a, x_m, ks[6], G=G)
    jax.block_until_ready((weights, rho, scores_p, rho_log_p))

    assert weights.shape == (B, 2 * N_ASSETS)
    assert rho.shape == (B,)
    assert scores_p.shape == (B, N_ASSETS)
    assert rho_log_p.shape == (B,)
    assert bool(jnp.all(jnp.isfinite(weights)))
    assert bool(jnp.all(jnp.isfinite(rho_log_p)))
    # long book and short book each softmax-normalize to 1 -> total 2
    assert bool(jnp.allclose(jnp.sum(weights, axis=-1), 2.0, atol=5e-3))
    # exactly G long picks and G short picks per batch row
    assert bool(jnp.all(jnp.sum((weights > 0).astype(jnp.int32), axis=-1) == 2 * G))
    assert bool(jnp.allclose(jnp.sum(scores_p, axis=-1), 1.0, atol=5e-3))
    assert bool(jnp.all((rho >= 0.0) & (rho <= 1.0)))
    print("KERNEL_OK")
</pallas_src>

<mosaic_0001>
module attributes {stable_mosaic.version = 11 : i64} {
  func.func @_rl_actor_kernel(%arg0: memref<25x256xf32, #tpu.memory_space<vmem>>, %arg1: memref<2x34xf32, #tpu.memory_space<vmem>>, %arg2: memref<128x128xf32, #tpu.memory_space<vmem>>, %arg3: memref<16x128xf32, #tpu.memory_space<vmem>>) attributes {dimension_semantics = [], scalar_prefetch = 0 : i64, scratch_operands = 0 : i64, tpu.core_type = #tpu.core_type<tc>} {
    %c0 = arith.constant 0 : index
    %c0_0 = arith.constant 0 : index
    %0 = vector.load %arg2[%c0, %c0_0] : memref<128x128xf32, #tpu.memory_space<vmem>>, vector<33x25xf32>
    %c40 = arith.constant 40 : index
    %c0_1 = arith.constant 0 : index
    %1 = vector.load %arg2[%c40, %c0_1] : memref<128x128xf32, #tpu.memory_space<vmem>>, vector<1x33xf32>
    %c48 = arith.constant 48 : index
    %c0_2 = arith.constant 0 : index
    %2 = vector.load %arg2[%c48, %c0_2] : memref<128x128xf32, #tpu.memory_space<vmem>>, vector<33x33xf32>
    %c88 = arith.constant 88 : index
    %c0_3 = arith.constant 0 : index
    %3 = vector.load %arg2[%c88, %c0_3] : memref<128x128xf32, #tpu.memory_space<vmem>>, vector<33x2xf32>
    %c0_4 = arith.constant 0 : index
    %c0_5 = arith.constant 0 : index
    %4 = vector.load %arg0[%c0_4, %c0_5] : memref<25x256xf32, #tpu.memory_space<vmem>>, vector<25x256xf32>
    %cst = arith.constant dense<0.000000e+00> : vector<33x256xf32>
    %5 = tpu.matmul %0, %4, %cst {dimension_numbers = #tpu.dot_dimension_numbers<[1], [0], [0], [1], [0, 0, 1, 1], [], []>} : vector<33x25xf32>, vector<25x256xf32>, vector<33x256xf32> -> vector<33x256xf32>
    %cst_6 = arith.constant 0.000000e+00 : f32
    %6 = vector.broadcast %cst_6 : f32 to vector<33x256xf32>
    %7 = arith.maximumf %5, %6 : vector<33x256xf32>
    %cst_7 = arith.constant dense<0.000000e+00> : vector<1x256xf32>
    %8 = tpu.matmul %1, %7, %cst_7 {dimension_numbers = #tpu.dot_dimension_numbers<[1], [0], [0], [1], [0, 0, 1, 1], [], []>} : vector<1x33xf32>, vector<33x256xf32>, vector<1x256xf32> -> vector<1x256xf32>
    %9 = vector.extract_strided_slice %8 {offsets = [0, 0], sizes = [1, 128], strides = [1, 1]} : vector<1x256xf32> to vector<1x128xf32>
    %10 = vector.extract_strided_slice %8 {offsets = [0, 128], sizes = [1, 128], strides = [1, 1]} : vector<1x256xf32> to vector<1x128xf32>
    %11 = tpu.concatenate %9, %10 in 0 : vector<1x128xf32>, vector<1x128xf32> -> vector<2x128xf32>
    %12 = tpu.iota {dimensions = array<i32: 1>} : vector<2x128xi32>
    %c8_i32 = arith.constant 8 : i32
    %13 = vector.broadcast %c8_i32 : i32 to vector<2x128xi32>
    %14 = arith.cmpi slt, %12, %13 : vector<2x128xi32>
    %cst_8 = arith.constant 0xFF800000 : f32
    %15 = vector.broadcast %cst_8 : f32 to vector<2x128xf32>
    %16 = arith.select %14, %11, %15 : vector<2x128xi1>, vector<2x128xf32>
    %cst_9 = arith.constant dense<0xFF800000> : vector<2xf32>
    %17 = vector.multi_reduction <maximumf>, %16, %cst_9 [1] : vector<2x128xf32> to vector<2xf32>
    %18 = vector.shape_cast %17 : vector<2xf32> to vector<2x1xf32>
    %19 = vector.broadcast %18 : vector<2x1xf32> to vector<2x128xf32>
    %20 = arith.subf %16, %19 : vector<2x128xf32>
    %21 = math.exp %20 : vector<2x128xf32>
    %cst_10 = arith.constant dense<0.000000e+00> : vector<2xf32>
    %22 = vector.multi_reduction <add>, %21, %cst_10 [1] : vector<2x128xf32> to vector<2xf32>
    %23 = vector.shape_cast %22 : vector<2xf32> to vector<2x1xf32>
    %cst_11 = arith.constant 1.000000e+00 : f32
    %24 = vector.broadcast %cst_11 : f32 to vector<2x1xf32>
    %25 = arith.divf %24, %23 : vector<2x1xf32>
    %26 = vector.broadcast %25 : vector<2x1xf32> to vector<2x128xf32>
    %27 = arith.mulf %21, %26 : vector<2x128xf32>
    %cst_12 = arith.constant 0.000000e+00 : f32
    %28 = vector.broadcast %cst_12 : f32 to vector<2x128xf32>
    %29 = arith.cmpf ogt, %11, %28 : vector<2x128xf32>
    %cst_13 = arith.constant 0.000000e+00 : f32
    %30 = vector.broadcast %cst_13 : f32 to vector<2x128xf32>
    %31 = arith.cmpf olt, %11, %30 : vector<2x128xf32>
    %cst_14 = arith.constant -1.000000e+00 : f32
    %cst_15 = arith.constant 0.000000e+00 : f32
    %32 = vector.broadcast %cst_14 : f32 to vector<2x128xf32>
    %33 = vector.broadcast %cst_15 : f32 to vector<2x128xf32>
    %34 = arith.select %31, %32, %33 : vector<2x128xi1>, vector<2x128xf32>
    %cst_16 = arith.constant 1.000000e+00 : f32
    %35 = vector.broadcast %cst_16 : f32 to vector<2x128xf32>
    %36 = arith.select %29, %35, %34 : vector<2x128xi1>, vector<2x128xf32>
    %cst_17 = arith.constant 1.000000e+00 : f32
    %37 = vector.broadcast %cst_17 : f32 to vector<2x128xf32>
    %38 = arith.subf %37, %11 : vector<2x128xf32>
    %39 = arith.mulf %36, %38 : vector<2x128xf32>
    %40 = tpu.concatenate %11, %39 in 0 : vector<2x128xf32>, vector<2x128xf32> -> vector<4x128xf32>
    %41 = tpu.iota {dimensions = array<i32: 1>} : vector<4x128xi32>
    %c8_i32_18 = arith.constant 8 : i32
    %42 = vector.broadcast %c8_i32_18 : i32 to vector<4x128xi32>
    %43 = arith.cmpi slt, %41, %42 : vector<4x128xi32>
    %cst_19 = arith.constant 0xFF800000 : f32
    %44 = vector.broadcast %cst_19 : f32 to vector<4x128xf32>
    %45 = arith.select %43, %40, %44 : vector<4x128xi1>, vector<4x128xf32>
    %46 = tpu.iota {dimensions = array<i32: 0>} : vector<128x128xi32>
    %47 = tpu.iota {dimensions = array<i32: 1>} : vector<128x128xi32>
    %48 = arith.cmpi sle, %46, %47 : vector<128x128xi32>
    %49 = arith.extui %48 : vector<128x128xi1> to vector<128x128xi32>
    %50 = arith.sitofp %49 : vector<128x128xi32> to vector<128x128xf32>
    %cst_20 = arith.constant dense<0xFF800000> : vector<4xf32>
    %51 = vector.multi_reduction <maximumf>, %45, %cst_20 [1] : vector<4x128xf32> to vector<4xf32>
    %52 = vector.shape_cast %51 : vector<4xf32> to vector<4x1xf32>
    %false = arith.constant false
    %53 = vector.broadcast %false : i1 to vector<4x128xi1>
    %cst_21 = arith.constant dense<0xFF800000> : vector<4xf32>
    %54 = vector.multi_reduction <maximumf>, %45, %cst_21 [1] : vector<4x128xf32> to vector<4xf32>
    %55 = vector.shape_cast %54 : vector<4xf32> to vector<4x1xf32>
    %56 = vector.broadcast %55 : vector<4x1xf32> to vector<4x128xf32>
    %57 = arith.cmpf oeq, %45, %56 : vector<4x128xf32>
    %58 = arith.extui %57 : vector<4x128xi1> to vector<4x128xi32>
    %59 = arith.sitofp %58 : vector<4x128xi32> to vector<4x128xf32>
    %cst_22 = arith.constant dense<0.000000e+00> : vector<4x128xf32>
    %60 = tpu.matmul %59, %50, %cst_22 {dimension_numbers = #tpu.dot_dimension_numbers<[1], [0], [0], [1], [0, 0, 1, 1], [], []>} : vector<4x128xf32>, vector<128x128xf32>, vector<4x128xf32> -> vector<4x128xf32>
    %cst_23 = arith.constant 1.500000e+00 : f32
    %61 = vector.broadcast %cst_23 : f32 to vector<4x128xf32>
    %62 = arith.cmpf olt, %60, %61 : vector<4x128xf32>
    %63 = arith.andi %57, %62 : vector<4x128xi1>
    %64 = arith.ori %53, %63 : vector<4x128xi1>
    %cst_24 = arith.constant 0xFF800000 : f32
    %65 = vector.broadcast %cst_24 : f32 to vector<4x128xf32>
    %66 = arith.select %63, %65, %45 : vector<4x128xi1>, vector<4x128xf32>
    %cst_25 = arith.constant dense<0xFF800000> : vector<4xf32>
    %67 = vector.multi_reduction <maximumf>, %66, %cst_25 [1] : vector<4x128xf32> to vector<4xf32>
    %68 = vector.shape_cast %67 : vector<4xf32> to vector<4x1xf32>
    %69 = vector.broadcast %68 : vector<4x1xf32> to vector<4x128xf32>
    %70 = arith.cmpf oeq, %66, %69 : vector<4x128xf32>
    %71 = arith.extui %70 : vector<4x128xi1> to vector<4x128xi32>
    %72 = arith.sitofp %71 : vector<4x128xi32> to vector<4x128xf32>
    %cst_26 = arith.constant dense<0.000000e+00> : vector<4x128xf32>
    %73 = tpu.matmul %72, %50, %cst_26 {dimension_numbers = #tpu.dot_dimension_numbers<[1], [0], [0], [1], [0, 0, 1, 1], [], []>} : vector<4x128xf32>, vector<128x128xf32>, vector<4x128xf32> -> vector<4x128xf32>
    %cst_27 = arith.constant 1.500000e+00 : f32
    %74 = vector.broadcast %cst_27 : f32 to vector<4x128xf32>
    %75 = arith.cmpf olt, %73, %74 : vector<4x128xf32>
    %76 = arith.andi %70, %75 : vector<4x128xi1>
    %77 = arith.ori %64, %76 : vector<4x128xi1>
    %78 = vector.broadcast %52 : vector<4x1xf32> to vector<4x128xf32>
    %79 = arith.subf %45, %78 : vector<4x128xf32>
    %80 = math.exp %79 : vector<4x128xf32>
    %cst_28 = arith.constant 0.000000e+00 : f32
    %81 = vector.broadcast %cst_28 : f32 to vector<4x128xf32>
    %82 = arith.select %77, %80, %81 : vector<4x128xi1>, vector<4x128xf32>
    %cst_29 = arith.constant dense<0.000000e+00> : vector<4xf32>
    %83 = vector.multi_reduction <add>, %82, %cst_29 [1] : vector<4x128xf32> to vector<4xf32>
    %84 = vector.shape_cast %83 : vector<4xf32> to vector<4x1xf32>
    %cst_30 = arith.constant 1.000000e+00 : f32
    %85 = vector.broadcast %cst_30 : f32 to vector<4x1xf32>
    %86 = arith.divf %85, %84 : vector<4x1xf32>
    %87 = vector.broadcast %86 : vector<4x1xf32> to vector<4x128xf32>
    %88 = arith.mulf %82, %87 : vector<4x128xf32>
    %c0_31 = arith.constant 0 : index
    %c0_32 = arith.constant 0 : index
    %89 = vector.load %arg1[%c0_31, %c0_32] : memref<2x34xf32, #tpu.memory_space<vmem>>, vector<2x33xf32>
    %c0_33 = arith.constant 0 : index
    %c33 = arith.constant 33 : index
    %90 = vector.load %arg1[%c0_33, %c33] : memref<2x34xf32, #tpu.memory_space<vmem>>, vector<2x1xf32>
    %cst_34 = arith.constant dense<0.000000e+00> : vector<2x33xf32>
    %91 = tpu.matmul %89, %2, %cst_34 {dimension_numbers = #tpu.dot_dimension_numbers<[1], [0], [0], [1], [0, 0, 1, 1], [], []>} : vector<2x33xf32>, vector<33x33xf32>, vector<2x33xf32> -> vector<2x33xf32>
    %cst_35 = arith.constant 0.000000e+00 : f32
    %92 = vector.broadcast %cst_35 : f32 to vector<2x33xf32>
    %93 = arith.maximumf %91, %92 : vector<2x33xf32>
    %cst_36 = arith.constant dense<0.000000e+00> : vector<2x2xf32>
    %94 = tpu.matmul %93, %3, %cst_36 {dimension_numbers = #tpu.dot_dimension_numbers<[1], [0], [0], [1], [0, 0, 1, 1], [], []>} : vector<2x33xf32>, vector<33x2xf32>, vector<2x2xf32> -> vector<2x2xf32>
    %95 = vector.extract_strided_slice %94 {offsets = [0, 0], sizes = [2, 1], strides = [1, 1]} : vector<2x2xf32> to vector<2x1xf32>
    %96 = vector.extract_strided_slice %94 {offsets = [0, 1], sizes = [2, 1], strides = [1, 1]} : vector<2x2xf32> to vector<2x1xf32>
    %cst_37 = arith.constant 0.000000e+00 : f32
    %97 = vector.broadcast %cst_37 : f32 to vector<2x1xf32>
    %98 = arith.maximumf %96, %97 : vector<2x1xf32>
    %99 = math.absf %96 : vector<2x1xf32>
    %cst_38 = arith.constant 0.000000e+00 : f32
    %100 = vector.broadcast %cst_38 : f32 to vector<2x1xf32>
    %101 = arith.subf %100, %99 : vector<2x1xf32>
    %102 = math.exp %101 : vector<2x1xf32>
    %cst_39 = arith.constant 1.000000e+00 : f32
    %103 = vector.broadcast %cst_39 : f32 to vector<2x1xf32>
    %104 = arith.addf %103, %102 : vector<2x1xf32>
    %105 = math.log %104 : vector<2x1xf32>
    %106 = arith.addf %98, %105 : vector<2x1xf32>
    %cst_40 = arith.constant 9.99999996E-13 : f32
    %107 = vector.broadcast %cst_40 : f32 to vector<2x1xf32>
    %108 = arith.maximumf %106, %107 : vector<2x1xf32>
    %109 = arith.mulf %108, %90 : vector<2x1xf32>
    %110 = arith.addf %95, %109 : vector<2x1xf32>
    %cst_41 = arith.constant 0.000000e+00 : f32
    %cst_42 = arith.constant 1.000000e+00 : f32
    %111 = vector.broadcast %cst_41 : f32 to vector<2x1xf32>
    %112 = arith.maximumf %111, %110 : vector<2x1xf32>
    %113 = vector.broadcast %cst_42 : f32 to vector<2x1xf32>
    %114 = arith.minimumf %113, %112 : vector<2x1xf32>
    %cst_43 = arith.constant -5.000000e-01 : f32
    %115 = vector.broadcast %cst_43 : f32 to vector<2x1xf32>
    %116 = arith.mulf %115, %90 : vector<2x1xf32>
    %117 = arith.mulf %116, %90 : vector<2x1xf32>
    %118 = math.log %108 : vector<2x1xf32>
    %119 = arith.subf %117, %118 : vector<2x1xf32>
    %cst_44 = arith.constant 0.918938517 : f32
    %120 = vector.broadcast %cst_44 : f32 to vector<2x1xf32>
    %121 = arith.subf %119, %120 : vector<2x1xf32>
    %cst_45 = arith.constant 0.000000e+00 : f32
    %122 = vector.broadcast %cst_45 : f32 to vector<16x128xf32>
    %c0_46 = arith.constant 0 : index
    %c0_47 = arith.constant 0 : index
    %123 = vector.load %arg3[%c0_46, %c0_47] : memref<16x128xf32, #tpu.memory_space<vmem>>, vector<16x128xf32>
    tpu.vector_store %arg3[%c0_46, %c0_47], %122 {strides = array<i32>} : memref<16x128xf32, #tpu.memory_space<vmem>>, vector<16x128xf32>,
    %c0_48 = arith.constant 0 : index
    %c0_49 = arith.constant 0 : index
    %124 = vector.load %arg3[%c0_48, %c0_49] : memref<16x128xf32, #tpu.memory_space<vmem>>, vector<4x128xf32>
    tpu.vector_store %arg3[%c0_48, %c0_49], %88 {strides = array<i32>} : memref<16x128xf32, #tpu.memory_space<vmem>>, vector<4x128xf32>,
    %c4 = arith.constant 4 : index
    %c0_50 = arith.constant 0 : index
    %125 = vector.load %arg3[%c4, %c0_50] : memref<16x128xf32, #tpu.memory_space<vmem>>, vector<2x128xf32>
    tpu.vector_store %arg3[%c4, %c0_50], %27 {strides = array<i32>} : memref<16x128xf32, #tpu.memory_space<vmem>>, vector<2x128xf32>,
    %c6 = arith.constant 6 : index
    %c0_51 = arith.constant 0 : index
    %126 = vector.load %arg3[%c6, %c0_51] : memref<16x128xf32, #tpu.memory_space<vmem>>, vector<2x1xf32>
    tpu.vector_store %arg3[%c6, %c0_51], %114 {strides = array<i32>} : memref<16x128xf32, #tpu.memory_space<vmem>>, vector<2x1xf32>,
    %c8 = arith.constant 8 : index
    %c0_52 = arith.constant 0 : index
    %127 = vector.load %arg3[%c8, %c0_52] : memref<16x128xf32, #tpu.memory_space<vmem>>, vector<2x1xf32>
    tpu.vector_store %arg3[%c8, %c0_52], %121 {strides = array<i32>} : memref<16x128xf32, #tpu.memory_space<vmem>>, vector<2x1xf32>,
    return
  }
}

</mosaic_0001>

<llo_original>
// kernel: rl_actor_forward.1
$region0: #{rl_actor_forward.1}
  #allocation0 [shape = 'u32[]', space=smem, size = 0x4, offset = 0x4, fixed_abs, tag = 'smem constant byte address 0x4 - core index']
  #allocation1 [shape = 'u32[144,128]{1,0:T(1,128)}', space=vmem, size = 0x12000, scoped, tag = 'internal scratch']
  %s0 = inlined_call_operand.vmem [shape: f32[25,256], index: 0, kind: input, shape index: {}]
  %s1 = inlined_call_operand.vmem [shape: f32[2,34], index: 1, kind: input, shape index: {}]
  %s2 = inlined_call_operand.vmem [shape: f32[128,128], index: 2, kind: input, shape index: {}]
  %s3 = inlined_call_operand.vmem [shape: f32[16,128], index: 3, kind: output, shape index: {}]
  %s4 = sld [smem:[#allocation0]]
  $region22: #{rl_actor_forward.1} parent=0
    _
  %s6 = ssub.s32 1, %s4
  %s7 = scalar_select 0, %s6, %s4
  // Predicated region
  $region2: #{rl_actor_forward.1} parent=0 // pred_check
    _
  $region3: #{rl_actor_forward.1} parent=0 // pred_check_branch
    %9 = sbr.rel (0) target = $region5
  $region4: #{rl_actor_forward.1} parent=0 // pred_region
    _
  $region5: #{rl_actor_forward.1} parent=0 // pred_fallthru
    _
  // Predicated region
  $region6: #{rl_actor_forward.1} parent=0 // pred_check
    _
  $region7: #{rl_actor_forward.1} parent=0 // pred_check_branch
    %11 = sbr.rel (0) target = $region9
  $region8: #{rl_actor_forward.1} parent=0 // pred_region
    _
  $region9: #{rl_actor_forward.1} parent=0 // pred_fallthru
    _
  // Predicated region
  $region10: #{rl_actor_forward.1} parent=0 // pred_check
    _
  $region11: #{rl_actor_forward.1} parent=0 // pred_check_branch
    %13 = sbr.rel (0) target = $region13
  $region12: #{rl_actor_forward.1} parent=0 // pred_region
    _
  $region13: #{rl_actor_forward.1} parent=0 // pred_fallthru
    _
  %v14 = vld [vmem:[%s2] sm:$0xff]
  %v15 = vld [vmem:[%s2 + $0x8] sm:$0xff]
  %v16 = vld [vmem:[%s2 + $0x10] sm:$0xff]
  %v17 = vld [vmem:[%s2 + $0x18] sm:$0xff]
  %v18 = vld [vmem:[%s2 + $0x20] sm:$0x1]
  %v19 = vld [vmem:[%s2 + $0x28] sm:$0x1]
  %v20 = vld [vmem:[%s2 + $0x30] sm:$0xff]
  %v21 = vld [vmem:[%s2 + $0x38] sm:$0xff]
  %v22 = vld [vmem:[%s2 + $0x40] sm:$0xff]
  %v23 = vld [vmem:[%s2 + $0x48] sm:$0xff]
  %v24 = vld [vmem:[%s2 + $0x50] sm:$0x1]
  %v25 = vld [vmem:[%s2 + $0x58] sm:$0xff]
  %v26 = vld [vmem:[%s2 + $0x60] sm:$0xff]
  %v27 = vld [vmem:[%s2 + $0x68] sm:$0xff]
  %v28 = vld [vmem:[%s2 + $0x70] sm:$0xff]
  %v29 = vld [vmem:[%s2 + $0x78] sm:$0x1]
  %v30 = vld [vmem:[%s0] sm:$0xff]
  %v31 = vld [vmem:[%s0 + $0x8] sm:$0xff]
  %v32 = vld [vmem:[%s0 + $0x10] sm:$0xff]
  %v33 = vld [vmem:[%s0 + $0x18] sm:$0xff]
  %v34 = vld [vmem:[%s0 + $0x20] sm:$0xff]
  %v35 = vld [vmem:[%s0 + $0x28] sm:$0xff]
  %v36 = vld [vmem:[%s0 + $0x30] sm:$0x1]
  %v37 = vld [vmem:[%s0 + $0x38] sm:$0x1]
  %vm38 = vcmask 203776
  %v40 = vsel %vm38, %v14, 0
  %v43 = vsel %vm38, %v15, 0
  %v46 = vsel %vm38, %v16, 0
  %v49 = vsel %vm38, %v17, 0
  %v52 = vsel %vm38, %v18, 0
  %vm54 = vcmask 1040384
  %v56 = vsel %vm54, %v36, 0
  %v59 = vsel %vm54, %v37, 0
  %61 = vmatprep.subr.mxu0 0.0
  %62 = vmatpush1.msra.mxu0 0.0
  %63 = vmatprep.subr.mxu0 0.0
  %64 = vmatpush1.msra.mxu0 0.0
  %65 = vmatprep.subr.mxu0 0.0
  %66 = vmatpush1.msra.mxu0 0.0
  %67 = vmatprep.subr.mxu0 0.0
  %68 = vmatpush1.msra.mxu0 0.0
  %69 = vmatprep.subr.mxu0 0.0
  %70 = vmatpush1.msra.mxu0 0.0
  %71 = vmatprep.subr.mxu0 0.0
  %72 = vmatpush1.msra.mxu0 0.0
  %73 = vmatprep.subr.mxu0 0.0
  %74 = vmatpush1.msra.mxu0 0.0
  %75 = vmatprep.subr.mxu0 0.0
  %76 = vmatpush1.msra.mxu0 0.0
  %77 = vmatprep.subr.mxu0 0.0
  %78 = vmatpush1.msra.mxu0 0.0
  %79 = vmatprep.subr.mxu0 0.0
  %80 = vmatpush1.msra.mxu0 0.0
  %81 = vmatprep.subr.mxu0 0.0
  %82 = vmatpush1.msra.mxu0 0.0
  %83 = vmatprep.subr.mxu0 0.0
  %84 = vmatpush1.msra.mxu0 0.0
  %85 = vmatprep.subr.mxu0 %v59
  %86 = vmatpush1.msra.mxu0 %v56
  %87 = vmatprep.subr.mxu0 %v35
  %88 = vmatpush1.msra.mxu0 %v34
  %89 = vmatprep.subr.mxu0 %v33
  %90 = vmatpush1.msra.mxu0 %v32
  %91 = vmatprep.subr.mxu0 %v31
  %92 = vmatpush1.msra.mxu0 %v30
  %93 = vmatprep.subr.mxu0 0.0
  %94 = vmatpush2.msra.mxu0 0.0
  %95 = vmatprep.subr.mxu0 0.0
  %96 = vmatpush2.msra.mxu0 0.0
  %97 = vmatprep.subr.mxu0 0.0
  %98 = vmatpush2.msra.mxu0 0.0
  %99 = vmatprep.subr.mxu0 0.0
  %100 = vmatpush2.msra.mxu0 0.0
  %101 = vmatprep.subr.mxu0 0.0
  %102 = vmatpush2.msra.mxu0 0.0
  %103 = vmatprep.subr.mxu0 0.0
  %104 = vmatpush2.msra.mxu0 0.0
  %105 = vmatprep.subr.mxu0 0.0
  %106 = vmatpush2.msra.mxu0 0.0
  %107 = vmatprep.subr.mxu0 0.0
  %108 = vmatpush2.msra.mxu0 0.0
  %109 = vmatprep.subr.mxu0 0.0
  %110 = vmatpush2.msra.mxu0 0.0
  %111 = vmatprep.subr.mxu0 0.0
  %112 = vmatpush2.msra.mxu0 0.0
  %113 = vmatprep.subr.mxu0 0.0
  %114 = vmatpush2.msra.mxu0 0.0
  %115 = vmatprep.subr.mxu0 0.0
  %116 = vmatpush2.msra.mxu0 0.0
  %117 = vmatprep.subr.mxu0 0.0
  %118 = vmatpush2.msra.mxu0 0.0
  %119 = vmatprep.subr.mxu0 0.0
  %120 = vmatpush2.msra.mxu0 0.0
  %121 = vmatprep.subr.mxu0 0.0
  %122 = vmatpush2.msra.mxu0 0.0
  %123 = vmatprep.subr.mxu0 0.0
  %124 = vmatpush2.msra.mxu0 0.0
  %125 = vmatprep.mubr.f32.mxu0 0.0
  %126 = vmatmul.mubr.f32.gmra.mxu0 %v40
  %v127 = vpop.f32.mrf.mxu0
  %v128 = vadd.f32 0.0, %v127
  %v129 = vpop.f32.mrf.mxu0
  %v130 = vadd.f32 0.0, %v129
  %131 = vmatprep.mubr.f32.mxu0 0.0
  %132 = vmatmul.mubr.f32.gmra.mxu0 %v43
  %v133 = vpop.f32.mrf.mxu0
  %v134 = vadd.f32 0.0, %v133
  %v135 = vpop.f32.mrf.mxu0
  %v136 = vadd.f32 0.0, %v135
  %137 = vmatprep.mubr.f32.mxu0 0.0
  %138 = vmatmul.mubr.f32.gmra.mxu0 %v46
  %v139 = vpop.f32.mrf.mxu0
  %v140 = vadd.f32 0.0, %v139
  %v141 = vpop.f32.mrf.mxu0
  %v142 = vadd.f32 0.0, %v141
  %143 = vmatprep.mubr.f32.mxu0 0.0
  %144 = vmatmul.mubr.f32.gmra.mxu0 %v49
  %v145 = vpop.f32.mrf.mxu0
  %v146 = vadd.f32 0.0, %v145
  %v147 = vpop.f32.mrf.mxu0
  %v148 = vadd.f32 0.0, %v147
  %149 = vmatprep.mubr.f32.mxu0 0.0
  %150 = vmatmul.mubr.f32.gmra.mxu0 %v52
  %v151 = vpop.f32.mrf.mxu0
  %v152 = vadd.f32 0.0, %v151
  %v153 = vpop.f32.mrf.mxu0
  %v154 = vadd.f32 0.0, %v153
  %155 = vdwg.mxu0
  %v156 = vmax.f32 %v128, 0.0
  %v157 = vmax.f32 %v130, 0.0
  %v158 = vmax.f32 %v134, 0.0
  %v159 = vmax.f32 %v136, 0.0
  %v160 = vmax.f32 %v140, 0.0
  %v161 = vmax.f32 %v142, 0.0
  %v162 = vmax.f32 %v146, 0.0
  %v163 = vmax.f32 %v148, 0.0
  %v164 = vmax.f32 %v152, 0.0
  %v165 = vmax.f32 %v154, 0.0
  %vm166 = vcmask 269312
  %v168 = vsel %vm166, %v19, 0
  %v171 = vsel %vm54, %v164, 0
  %v174 = vsel %vm54, %v165, 0
  %176 = vmatprep.subr.mxu0 0.0
  %177 = vmatpush1.msra.mxu0 0.0
  %178 = vmatprep.subr.mxu0 0.0
  %179 = vmatpush1.msra.mxu0 0.0
  %180 = vmatprep.subr.mxu0 0.0
  %181 = vmatpush1.msra.mxu0 0.0
  %182 = vmatprep.subr.mxu0 0.0
  %183 = vmatpush1.msra.mxu0 0.0
  %184 = vmatprep.subr.mxu0 0.0
  %185 = vmatpush1.msra.mxu0 0.0
  %186 = vmatprep.subr.mxu0 0.0
  %187 = vmatpush1.msra.mxu0 0.0
  %188 = vmatprep.subr.mxu0 0.0
  %189 = vmatpush1.msra.mxu0 0.0
  %190 = vmatprep.subr.mxu0 0.0
  %191 = vmatpush1.msra.mxu0 0.0
  %192 = vmatprep.subr.mxu0 0.0
  %193 = vmatpush1.msra.mxu0 0.0
  %194 = vmatprep.subr.mxu0 0.0
  %195 = vmatpush1.msra.mxu0 0.0
  %196 = vmatprep.subr.mxu0 0.0
  %197 = vmatpush1.msra.mxu0 0.0
  %198 = vmatprep.subr.mxu0 %v174
  %199 = vmatpush1.msra.mxu0 %v171
  %200 = vmatprep.subr.mxu0 %v163
  %201 = vmatpush1.msra.mxu0 %v162
  %202 = vmatprep.subr.mxu0 %v161
  %203 = vmatpush1.msra.mxu0 %v160
  %204 = vmatprep.subr.mxu0 %v159
  %205 = vmatpush1.msra.mxu0 %v158
  %206 = vmatprep.subr.mxu0 %v157
  %207 = vmatpush1.msra.mxu0 %v156
  %208 = vmatprep.subr.mxu0 0.0
  %209 = vmatpush2.msra.mxu0 0.0
  %210 = vmatprep.subr.mxu0 0.0
  %211 = vmatpush2.msra.mxu0 0.0
  %212 = vmatprep.subr.mxu0 0.0
  %213 = vmatpush2.msra.mxu0 0.0
  %214 = vmatprep.subr.mxu0 0.0
  %215 = vmatpush2.msra.mxu0 0.0
  %216 = vmatprep.subr.mxu0 0.0
  %217 = vmatpush2.msra.mxu0 0.0
  %218 = vmatprep.subr.mxu0 0.0
  %219 = vmatpush2.msra.mxu0 0.0
  %220 = vmatprep.subr.mxu0 0.0
  %221 = vmatpush2.msra.mxu0 0.0
  %222 = vmatprep.subr.mxu0 0.0
  %223 = vmatpush2.msra.mxu0 0.0
  %224 = vmatprep.subr.mxu0 0.0
  %225 = vmatpush2.msra.mxu0 0.0
  %226 = vmatprep.subr.mxu0 0.0
  %227 = vmatpush2.msra.mxu0 0.0
  %228 = vmatprep.subr.mxu0 0.0
  %229 = vmatpush2.msra.mxu0 0.0
  %230 = vmatprep.subr.mxu0 0.0
  %231 = vmatpush2.msra.mxu0 0.0
  %232 = vmatprep.subr.mxu0 0.0
  %233 = vmatpush2.msra.mxu0 0.0
  %234 = vmatprep.subr.mxu0 0.0
  %235 = vmatpush2.msra.mxu0 0.0
  %236 = vmatprep.subr.mxu0 0.0
  %237 = vmatpush2.msra.mxu0 0.0
  %238 = vmatprep.subr.mxu0 0.0
  %239 = vmatpush2.msra.mxu0 0.0
  %240 = vmatprep.mubr.f32.mxu0 0.0
  %241 = vmatmul.mubr.f32.gmra.mxu0 %v168
  %v242 = vpop.f32.mrf.mxu0
  %v243 = vadd.f32 0.0, %v242
  %v244 = vpop.f32.mrf.mxu0
  %v245 = vadd.f32 0.0, %v244
  %246 = vdwg.mxu0
  %v248 = vrot.slane %v245, 7
  %v250 = vsel %vm54, %v243, %v248
  %v251 = vlaneseq
  %v252 = vand.u32 %v251, 127
  %vm253 = vcmp.lt.s32.totalorder %v252, 8
  %v254 = vsel %vm253, %v250, -inf
  %vm255 = vcmask 1041408
  %v256 = vsel %vm255, %v254, -inf
  %257 = vmax.xlane.f32.xlu0 %v256
  %v258 = vpop.xlane.xlu0 %257
  %v259 = vsub.f32 %v254, %v258
  %v260 = vmul.f32 %v259, 1.442695
  %v261 = vpow.pop %v260
  %v262 = vsel %vm255, %v261, 0.0
  %263 = vadd.xlane.f32.xlu0 %v262
  %v264 = vpop.xlane.xlu0 %263
  %v265 = vrcp.pop %v264
  %v266 = vmul.f32 1.0, %v265
  %v267 = vmul.f32 %v261, %v266
  %vm268 = vcmp.gt.f32.partialorder %v250, 0.0
  %vm269 = vcmp.lt.f32.partialorder %v250, 0.0
  %v270 = vsel %vm269, -1.0, 0.0
  %v271 = vsel %vm268, 1.0, %v270
  %v272 = vsub.f32 1.0, %v250
  %v273 = vmul.f32 %v271, %v272
  %v275 = vrot.slane %v273, 6
  %v277 = vsel %vm255, %v250, %v275
  %v278 = vsel %vm253, %v277, -inf
  %v279 = vlaneseq
  %v280 = vshrl.u32 %v279, 7
  %v281 = vadd.s32 %v280, 8
  %v282 = vadd.s32 %v280, 16
  %v283 = vadd.s32 %v280, 24
  %v284 = vadd.s32 %v280, 32
  %v285 = vadd.s32 %v280, 40
  %v286 = vadd.s32 %v280, 48
  %v287 = vadd.s32 %v280, 56
  %v288 = vadd.s32 %v280, 64
  %v289 = vadd.s32 %v280, 72
  %v290 = vadd.s32 %v280, 80
  %v291 = vadd.s32 %v280, 88
  %v292 = vadd.s32 %v280, 96
  %v293 = vadd.s32 %v280, 104
  %v294 = vadd.s32 %v280, 112
  %v295 = vadd.s32 %v280, 120
  %vm296 = vcmp.le.s32.totalorder %v280, %v252
  %vm297 = vcmp.le.s32.totalorder %v281, %v252
  %vm298 = vcmp.le.s32.totalorder %v282, %v252
  %vm299 = vcmp.le.s32.totalorder %v283, %v252
  %vm300 = vcmp.le.s32.totalorder %v284, %v252
  %vm301 = vcmp.le.s32.totalorder %v285, %v252
  %vm302 = vcmp.le.s32.totalorder %v286, %v252
  %vm303 = vcmp.le.s32.totalorder %v287, %v252
  %vm304 = vcmp.le.s32.totalorder %v288, %v252
  %vm305 = vcmp.le.s32.totalorder %v289, %v252
  %vm306 = vcmp.le.s32.totalorder %v290, %v252
  %vm307 = vcmp.le.s32.totalorder %v291, %v252
  %vm308 = vcmp.le.s32.totalorder %v292, %v252
  %vm309 = vcmp.le.s32.totalorder %v293, %v252
  %vm310 = vcmp.le.s32.totalorder %v294, %v252
  %vm311 = vcmp.le.s32.totalorder %v295, %v252
  %v312 = vsel %vm296, 1, 0
  %v313 = vsel %vm297, 1, 0
  %v314 = vsel %vm298, 1, 0
  %v315 = vsel %vm299, 1, 0
  %v316 = vsel %vm300, 1, 0
  %v317 = vsel %vm301, 1, 0
  %v318 = vsel %vm302, 1, 0
  %v319 = vsel %vm303, 1, 0
  %v320 = vsel %vm304, 1, 0
  %v321 = vsel %vm305, 1, 0
  %v322 = vsel %vm306, 1, 0
  %v323 = vsel %vm307, 1, 0
  %v324 = vsel %vm308, 1, 0
  %v325 = vsel %vm309, 1, 0
  %v326 = vsel %vm310, 1, 0
  %v327 = vsel %vm311, 1, 0
  %v328 = vcvt.s32.f32 %v312
  %v329 = vcvt.s32.f32 %v313
  %v330 = vcvt.s32.f32 %v314
  %v331 = vcvt.s32.f32 %v315
  %v332 = vcvt.s32.f32 %v316
  %v333 = vcvt.s32.f32 %v317
  %v334 = vcvt.s32.f32 %v318
  %v335 = vcvt.s32.f32 %v319
  %v336 = vcvt.s32.f32 %v320
  %v337 = vcvt.s32.f32 %v321
  %v338 = vcvt.s32.f32 %v322
  %v339 = vcvt.s32.f32 %v323
  %v340 = vcvt.s32.f32 %v324
  %v341 = vcvt.s32.f32 %v325
  %v342 = vcvt.s32.f32 %v326
  %v343 = vcvt.s32.f32 %v327
  %vm344 = vcmask 1043456
  %v345 = vsel %vm344, %v278, -inf
  %346 = vmax.xlane.f32.xlu0 %v345
  %v347 = vpop.xlane.xlu0 %346
  %vm348 = vcmp.eq.f32.partialorder %v278, %v347
  %v349 = vsel %vm348, 1, 0
  %v350 = vcvt.s32.f32 %v349
  %351 = vmatprep.subr.mxu0 0.0
  %352 = vmatpush1.msra.mxu0 %v343
  %353 = vmatprep.subr.mxu0 0.0
  %354 = vmatpush1.msra.mxu0 %v342
  %355 = vmatprep.subr.mxu0 0.0
  %356 = vmatpush1.msra.mxu0 %v341
  %357 = vmatprep.subr.mxu0 0.0
  %358 = vmatpush1.msra.mxu0 %v340
  %359 = vmatprep.subr.mxu0 0.0
  %360 = vmatpush1.msra.mxu0 %v339
  %361 = vmatprep.subr.mxu0 0.0
  %362 = vmatpush1.msra.mxu0 %v338
  %363 = vmatprep.subr.mxu0 0.0
  %364 = vmatpush1.msra.mxu0 %v337
  %365 = vmatprep.subr.mxu0 0.0
  %366 = vmatpush1.msra.mxu0 %v336
  %367 = vmatprep.subr.mxu0 0.0
  %368 = vmatpush1.msra.mxu0 %v335
  %369 = vmatprep.subr.mxu0 0.0
  %370 = vmatpush1.msra.mxu0 %v334
  %371 = vmatprep.subr.mxu0 0.0
  %372 = vmatpush1.msra.mxu0 %v333
  %373 = vmatprep.subr.mxu0 0.0
  %374 = vmatpush1.msra.mxu0 %v332
  %375 = vmatprep.subr.mxu0 0.0
  %376 = vmatpush1.msra.mxu0 %v331
  %377 = vmatprep.subr.mxu0 0.0
  %378 = vmatpush1.msra.mxu0 %v330
  %379 = vmatprep.subr.mxu0 0.0
  %380 = vmatpush1.msra.mxu0 %v329
  %381 = vmatprep.subr.mxu0 0.0
  %382 = vmatpush1.msra.mxu0 %v328
  %383 = vmatprep.subr.mxu0 0.0
  %384 = vmatpush2.msra.mxu0 0.0
  %385 = vmatprep.subr.mxu0 0.0
  %386 = vmatpush2.msra.mxu0 0.0
  %387 = vmatprep.subr.mxu0 0.0
  %388 = vmatpush2.msra.mxu0 0.0
  %389 = vmatprep.subr.mxu0 0.0
  %390 = vmatpush2.msra.mxu0 0.0
  %391 = vmatprep.subr.mxu0 0.0
  %392 = vmatpush2.msra.mxu0 0.0
  %393 = vmatprep.subr.mxu0 0.0
  %394 = vmatpush2.msra.mxu0 0.0
  %395 = vmatprep.subr.mxu0 0.0
  %396 = vmatpush2.msra.mxu0 0.0
  %397 = vmatprep.subr.mxu0 0.0
  %398 = vmatpush2.msra.mxu0 0.0
  %399 = vmatprep.subr.mxu0 0.0
  %400 = vmatpush2.msra.mxu0 0.0
  %401 = vmatprep.subr.mxu0 0.0
  %402 = vmatpush2.msra.mxu0 0.0
  %403 = vmatprep.subr.mxu0 0.0
  %404 = vmatpush2.msra.mxu0 0.0
  %405 = vmatprep.subr.mxu0 0.0
  %406 = vmatpush2.msra.mxu0 0.0
  %407 = vmatprep.subr.mxu0 0.0
  %408 = vmatpush2.msra.mxu0 0.0
  %409 = vmatprep.subr.mxu0 0.0
  %410 = vmatpush2.msra.mxu0 0.0
  %411 = vmatprep.subr.mxu0 0.0
  %412 = vmatpush2.msra.mxu0 0.0
  %413 = vmatprep.subr.mxu0 0.0
  %414 = vmatpush2.msra.mxu0 0.0
  %415 = vmatprep.mubr.f32.mxu0 0.0
  %416 = vmatmul.mubr.f32.gmra.mxu0 %v350
  %v417 = vpop.f32.mrf.mxu0
  %v418 = vadd.f32 0.0, %v417
  %v419 = vpop.f32.mrf.mxu0
  %420 = vdwg.mxu0
  %vm421 = vcmp.lt.f32.partialorder %v418, 1.5
  %vm422 = vmand %vm348, %vm421
  %v423 = vsel %vm422, -inf, %v278
  %v424 = vsel %vm344, %v423, -inf
  %425 = vmax.xlane.f32.xlu0 %v424
  %v426 = vpop.xlane.xlu0 %425
  %vm427 = vcmp.eq.f32.partialorder %v423, %v426
  %v428 = vsel %vm427, 1, 0
  %v429 = vcvt.s32.f32 %v428
  %430 = vmatprep.subr.mxu0 0.0
  %431 = vmatpush1.msra.mxu0 %v343
  %432 = vmatprep.subr.mxu0 0.0
  %433 = vmatpush1.msra.mxu0 %v342
  %434 = vmatprep.subr.mxu0 0.0
  %435 = vmatpush1.msra.mxu0 %v341
  %436 = vmatprep.subr.mxu0 0.0
  %437 = vmatpush1.msra.mxu0 %v340
  %438 = vmatprep.subr.mxu0 0.0
  %439 = vmatpush1.msra.mxu0 %v339
  %440 = vmatprep.subr.mxu0 0.0
  %441 = vmatpush1.msra.mxu0 %v338
  %442 = vmatprep.subr.mxu0 0.0
  %443 = vmatpush1.msra.mxu0 %v337
  %444 = vmatprep.subr.mxu0 0.0
  %445 = vmatpush1.msra.mxu0 %v336
  %446 = vmatprep.subr.mxu0 0.0
  %447 = vmatpush1.msra.mxu0 %v335
  %448 = vmatprep.subr.mxu0 0.0
  %449 = vmatpush1.msra.mxu0 %v334
  %450 = vmatprep.subr.mxu0 0.0
  %451 = vmatpush1.msra.mxu0 %v333
  %452 = vmatprep.subr.mxu0 0.0
  %453 = vmatpush1.msra.mxu0 %v332
  %454 = vmatprep.subr.mxu0 0.0
  %455 = vmatpush1.msra.mxu0 %v331
  %456 = vmatprep.subr.mxu0 0.0
  %457 = vmatpush1.msra.mxu0 %v330
  %458 = vmatprep.subr.mxu0 0.0
  %459 = vmatpush1.msra.mxu0 %v329
  %460 = vmatprep.subr.mxu0 0.0
  %461 = vmatpush1.msra.mxu0 %v328
  %462 = vmatprep.subr.mxu0 0.0
  %463 = vmatpush2.msra.mxu0 0.0
  %464 = vmatprep.subr.mxu0 0.0
  %465 = vmatpush2.msra.mxu0 0.0
  %466 = vmatprep.subr.mxu0 0.0
  %467 = vmatpush2.msra.mxu0 0.0
  %468 = vmatprep.subr.mxu0 0.0
  %469 = vmatpush2.msra.mxu0 0.0
  %470 = vmatprep.subr.mxu0 0.0
  %471 = vmatpush2.msra.mxu0 0.0
  %472 = vmatprep.subr.mxu0 0.0
  %473 = vmatpush2.msra.mxu0 0.0
  %474 = vmatprep.subr.mxu0 0.0
  %475 = vmatpush2.msra.mxu0 0.0
  %476 = vmatprep.subr.mxu0 0.0
  %477 = vmatpush2.msra.mxu0 0.0
  %478 = vmatprep.subr.mxu0 0.0
  %479 = vmatpush2.msra.mxu0 0.0
  %480 = vmatprep.subr.mxu0 0.0
  %481 = vmatpush2.msra.mxu0 0.0
  %482 = vmatprep.subr.mxu0 0.0
  %483 = vmatpush2.msra.mxu0 0.0
  %484 = vmatprep.subr.mxu0 0.0
  %485 = vmatpush2.msra.mxu0 0.0
  %486 = vmatprep.subr.mxu0 0.0
  %487 = vmatpush2.msra.mxu0 0.0
  %488 = vmatprep.subr.mxu0 0.0
  %489 = vmatpush2.msra.mxu0 0.0
  %490 = vmatprep.subr.mxu0 0.0
  %491 = vmatpush2.msra.mxu0 0.0
  %492 = vmatprep.subr.mxu0 0.0
  %493 = vmatpush2.msra.mxu0 0.0
  %494 = vmatprep.mubr.f32.mxu0 0.0
  %495 = vmatmul.mubr.f32.gmra.mxu0 %v429
  %v496 = vpop.f32.mrf.mxu0
  %v497 = vadd.f32 0.0, %v496
  %v498 = vpop.f32.mrf.mxu0
  %499 = vdwg.mxu0
  %vm500 = vcmp.lt.f32.partialorder %v497, 1.5
  %vm501 = vmand %vm427, %vm500
  %vm502 = vmor %vm422, %vm501
  %v503 = vsub.f32 %v278, %v347
  %v504 = vmul.f32 %v503, 1.442695
  %v505 = vpow.pop %v504
  %v506 = vsel %vm502, %v505, 0.0
  %v507 = vsel %vm344, %v506, 0.0
  %508 = vadd.xlane.f32.xlu0 %v507
  %v509 = vpop.xlane.xlu0 %508
  %v510 = vrcp.pop %v509
  %v511 = vmul.f32 1.0, %v510
  %v512 = vmul.f32 %v506, %v511
  %v513 = vld [vmem:[%s1] sm:$0x3]
  %v515 = vsel %vm166, %v513, 0
  %v518 = vsel %vm54, %v24, 0
  %520 = vmatprep.subr.mxu0 0.0
  %521 = vmatpush1.msra.mxu0 0.0
  %522 = vmatprep.subr.mxu0 0.0
  %523 = vmatpush1.msra.mxu0 0.0
  %524 = vmatprep.subr.mxu0 0.0
  %525 = vmatpush1.msra.mxu0 0.0
  %526 = vmatprep.subr.mxu0 0.0
  %527 = vmatpush1.msra.mxu0 0.0
  %528 = vmatprep.subr.mxu0 0.0
  %529 = vmatpush1.msra.mxu0 0.0
  %530 = vmatprep.subr.mxu0 0.0
  %531 = vmatpush1.msra.mxu0 0.0
  %532 = vmatprep.subr.mxu0 0.0
  %533 = vmatpush1.msra.mxu0 0.0
  %534 = vmatprep.subr.mxu0 0.0
  %535 = vmatpush1.msra.mxu0 0.0
  %536 = vmatprep.subr.mxu0 0.0
  %537 = vmatpush1.msra.mxu0 0.0
  %538 = vmatprep.subr.mxu0 0.0
  %539 = vmatpush1.msra.mxu0 0.0
  %540 = vmatprep.subr.mxu0 0.0
  %541 = vmatpush1.msra.mxu0 0.0
  %542 = vmatprep.subr.mxu0 0.0
  %543 = vmatpush1.msra.mxu0 %v518
  %544 = vmatprep.subr.mxu0 0.0
  %545 = vmatpush1.msra.mxu0 %v23
  %546 = vmatprep.subr.mxu0 0.0
  %547 = vmatpush1.msra.mxu0 %v22
  %548 = vmatprep.subr.mxu0 0.0
  %549 = vmatpush1.msra.mxu0 %v21
  %550 = vmatprep.subr.mxu0 0.0
  %551 = vmatpush1.msra.mxu0 %v20
  %552 = vmatprep.subr.mxu0 0.0
  %553 = vmatpush2.msra.mxu0 0.0
  %554 = vmatprep.subr.mxu0 0.0
  %555 = vmatpush2.msra.mxu0 0.0
  %556 = vmatprep.subr.mxu0 0.0
  %557 = vmatpush2.msra.mxu0 0.0
  %558 = vmatprep.subr.mxu0 0.0
  %559 = vmatpush2.msra.mxu0 0.0
  %560 = vmatprep.subr.mxu0 0.0
  %561 = vmatpush2.msra.mxu0 0.0
  %562 = vmatprep.subr.mxu0 0.0
  %563 = vmatpush2.msra.mxu0 0.0
  %564 = vmatprep.subr.mxu0 0.0
  %565 = vmatpush2.msra.mxu0 0.0
  %566 = vmatprep.subr.mxu0 0.0
  %567 = vmatpush2.msra.mxu0 0.0
  %568 = vmatprep.subr.mxu0 0.0
  %569 = vmatpush2.msra.mxu0 0.0
  %570 = vmatprep.subr.mxu0 0.0
  %571 = vmatpush2.msra.mxu0 0.0
  %572 = vmatprep.subr.mxu0 0.0
  %573 = vmatpush2.msra.mxu0 0.0
  %574 = vmatprep.subr.mxu0 0.0
  %575 = vmatpush2.msra.mxu0 0.0
  %576 = vmatprep.subr.mxu0 0.0
  %577 = vmatpush2.msra.mxu0 0.0
  %578 = vmatprep.subr.mxu0 0.0
  %579 = vmatpush2.msra.mxu0 0.0
  %580 = vmatprep.subr.mxu0 0.0
  %581 = vmatpush2.msra.mxu0 0.0
  %582 = vmatprep.subr.mxu0 0.0
  %583 = vmatpush2.msra.mxu0 0.0
  %584 = vmatprep.mubr.f32.mxu0 0.0
  %585 = vmatmul.mubr.f32.gmra.mxu0 %v515
  %v586 = vpop.f32.mrf.mxu0
  %v587 = vadd.f32 0.0, %v586
  %v588 = vpop.f32.mrf.mxu0
  %589 = vdwg.mxu0
  %v590 = vmax.f32 %v587, 0.0
  %v592 = vsel %vm166, %v590, 0
  %v595 = vsel %vm54, %v29, 0
  %597 = vmatprep.subr.mxu0 0.0
  %598 = vmatpush1.msra.mxu0 0.0
  %599 = vmatprep.subr.mxu0 0.0
  %600 = vmatpush1.msra.mxu0 0.0
  %601 = vmatprep.subr.mxu0 0.0
  %602 = vmatpush1.msra.mxu0 0.0
  %603 = vmatprep.subr.mxu0 0.0
  %604 = vmatpush1.msra.mxu0 0.0
  %605 = vmatprep.subr.mxu0 0.0
  %606 = vmatpush1.msra.mxu0 0.0
  %607 = vmatprep.subr.mxu0 0.0
  %608 = vmatpush1.msra.mxu0 0.0
  %609 = vmatprep.subr.mxu0 0.0
  %610 = vmatpush1.msra.mxu0 0.0
  %611 = vmatprep.subr.mxu0 0.0
  %612 = vmatpush1.msra.mxu0 0.0
  %613 = vmatprep.subr.mxu0 0.0
  %614 = vmatpush1.msra.mxu0 0.0
  %615 = vmatprep.subr.mxu0 0.0
  %616 = vmatpush1.msra.mxu0 0.0
  %617 = vmatprep.subr.mxu0 0.0
  %618 = vmatpush1.msra.mxu0 0.0
  %619 = vmatprep.subr.mxu0 0.0
  %620 = vmatpush1.msra.mxu0 %v595
  %621 = vmatprep.subr.mxu0 0.0
  %622 = vmatpush1.msra.mxu0 %v28
  %623 = vmatprep.subr.mxu0 0.0
  %624 = vmatpush1.msra.mxu0 %v27
  %625 = vmatprep.subr.mxu0 0.0
  %626 = vmatpush1.msra.mxu0 %v26
  %627 = vmatprep.subr.mxu0 0.0
  %628 = vmatpush1.msra.mxu0 %v25
  %629 = vmatprep.subr.mxu0 0.0
  %630 = vmatpush2.msra.mxu0 0.0
  %631 = vmatprep.subr.mxu0 0.0
  %632 = vmatpush2.msra.mxu0 0.0
  %633 = vmatprep.subr.mxu0 0.0
  %634 = vmatpush2.msra.mxu0 0.0
  %635 = vmatprep.subr.mxu0 0.0
  %636 = vmatpush2.msra.mxu0 0.0
  %637 = vmatprep.subr.mxu0 0.0
  %638 = vmatpush2.msra.mxu0 0.0
  %639 = vmatprep.subr.mxu0 0.0
  %640 = vmatpush2.msra.mxu0 0.0
  %641 = vmatprep.subr.mxu0 0.0
  %642 = vmatpush2.msra.mxu0 0.0
  %643 = vmatprep.subr.mxu0 0.0
  %644 = vmatpush2.msra.mxu0 0.0
  %645 = vmatprep.subr.mxu0 0.0
  %646 = vmatpush2.msra.mxu0 0.0
  %647 = vmatprep.subr.mxu0 0.0
  %648 = vmatpush2.msra.mxu0 0.0
  %649 = vmatprep.subr.mxu0 0.0
  %650 = vmatpush2.msra.mxu0 0.0
  %651 = vmatprep.subr.mxu0 0.0
  %652 = vmatpush2.msra.mxu0 0.0
  %653 = vmatprep.subr.mxu0 0.0
  %654 = vmatpush2.msra.mxu0 0.0
  %655 = vmatprep.subr.mxu0 0.0
  %656 = vmatpush2.msra.mxu0 0.0
  %657 = vmatprep.subr.mxu0 0.0
  %658 = vmatpush2.msra.mxu0 0.0
  %659 = vmatprep.subr.mxu0 0.0
  %660 = vmatpush2.msra.mxu0 0.0
  %661 = vmatprep.mubr.f32.mxu0 0.0
  %662 = vmatmul.mubr.f32.gmra.mxu0 %v592
  %v663 = vpop.f32.mrf.mxu0
  %v664 = vadd.f32 0.0, %v663
  %v665 = vpop.f32.mrf.mxu0
  %666 = vdwg.mxu0
  %v667 = vmax.f32 %v664, 0.0
  %v668 = vand.u32 2147483647, %v664
  %v669 = vsub.f32 0.0, %v668
  %v670 = vmul.f32 %v669, 1.442695
  %v671 = vpow.pop %v670
  %v672 = vadd.f32 %v671, 1.0
  %v673 = vlog2.pop %v672
  %v674 = vmul.f32 %v673, 0.6931472
  %v675 = vadd.f32 %v667, %v674
  %v676 = vmax.f32 %v675, 1e-12
  %677 = vrot.lane.b32.xlu0 %v513, 96
  %v678 = vpop.permute.xlu0 %677
  %v680 = vmul.f32 %v676, %v678
  %682 = vrot.lane.b32.xlu0 %v680, 127
  %v683 = vpop.permute.xlu0 %682
  %v685 = vadd.f32 %v664, %v683
  %v686 = vmax.f32 %v685, 0.0
  %v687 = vmin.f32 %v686, 1.0
  %v688 = vmul.f32 %v513, -0.5
  %v689 = vmul.f32 %v688, %v513
  %v690 = vlog2.pop %v676
  %v691 = vmul.f32 %v690, 0.6931472
  %693 = vrot.lane.b32.xlu0 %v691, 32
  %v694 = vpop.permute.xlu0 %693
  %v696 = vsub.f32 %v689, %v694
  %v697 = vsub.f32 %v696, 0.9189385
  %698 = vst [vmem:[%s3] sm:$0xff] 0.0
  %699 = vst [vmem:[%s3 + $0x8] sm:$0xff] 0.0
  %700 = vst [vmem:[%s3] sm:$0xf] %v512
  %701 = vst [vmem:[%s3 + $0x4] sm:$0x3] %v267
  %vm702 = vcmask 1024
  %703 = vst.msk [vmem:[%s3 + $0x6] sm:$0x3] %vm702, %v687
  %705 = vrot.lane.b32.xlu0 %v697, 95
  %v706 = vpop.permute.xlu0 %705
  %708 = vst.msk [vmem:[%s3 + $0x8] sm:$0x3] %vm702, %v706
  // Predicated region
  $region14: #{rl_actor_forward.1} parent=0 // pred_check
    _
  $region15: #{rl_actor_forward.1} parent=0 // pred_check_branch
    %710 = sbr.rel (0) target = $region17
  $region16: #{rl_actor_forward.1} parent=0 // pred_region
    _
  $region17: #{rl_actor_forward.1} parent=0 // pred_fallthru
    _
  // Predicated region
  $region18: #{rl_actor_forward.1} parent=0 // pred_check
    _
  $region19: #{rl_actor_forward.1} parent=0 // pred_check_branch
    %712 = sbr.rel (0) target = $region21
  $region20: #{rl_actor_forward.1} parent=0 // pred_region
    _
  $region21: #{rl_actor_forward.1} parent=0 // pred_fallthru
    _

</llo_original>
